<compile_context>
chip_gen: v5e
topology: v5e:2x2
jax: 0.10.0
libtpu: 0.0.40
codegen_flags: <defaults>
</compile_context>

<pallas_src>
import math

import jax
import jax.numpy as jnp
from jax.experimental import pallas as pl
from jax.experimental.pallas import tpu as pltpu


def _round_up(x, m):
    return ((x + m - 1) // m) * m


def _pick_tile(padded_dim, max_tile, align, min_tiles=1):
    """Largest multiple of `align` that divides `padded_dim` and is <= max_tile.

    If `min_tiles` > 1 and the dim is big enough, also require at least that many
    grid steps along the axis (megacore sharding on v7x comes from the N axis when
    the batch fits in one M tile).
    """
    cap = min(max_tile, padded_dim)
    if min_tiles > 1 and padded_dim >= min_tiles * align:
        cap = min(cap, padded_dim // min_tiles)
    best = align
    t = align
    while t <= cap:
        if padded_dim % t == 0:
            best = t
        t += align
    return best


def _filter_linear_kernel(x_ref, w_ref, b_ref, o_ref):
    # Grid = (M tiles, N tiles, K tiles); K (the reduction) innermost.
    k = pl.program_id(2)

    @pl.when(k == 0)
    def _():
        o_ref[...] = jnp.zeros_like(o_ref)

    # Masked weight is pre-folded (filter * W), pre-transposed to (K, N) and stored
    # in bf16; upcast on the VPU, accumulate in f32 directly into the resident
    # output block (out BlockSpec index ignores k).
    w = w_ref[...].astype(jnp.float32)                        # (tk, tn)
    o_ref[...] += jnp.dot(x_ref[...], w, preferred_element_type=jnp.float32)

    @pl.when(k == pl.num_programs(2) - 1)
    def _():
        o_ref[...] += b_ref[...]                              # (1, tn) broadcast


def prepare_filter_linear_params(weight, filter_mat, bias=None, *,
                                 param_dtype=jnp.bfloat16,
                                 tn_max=512, tk_max=1024, min_n_tiles=2):
    """One-time (amortized across GRU-D timesteps) parameter folding/packing.

    weight/filter_mat: (out_dim, in_dim); bias: (out_dim,) or None.
    """
    out_dim, in_dim = weight.shape
    Kp = _round_up(in_dim, 128)
    Np = _round_up(out_dim, 128)
    tk = _pick_tile(Kp, tk_max, 128)
    tn = _pick_tile(Np, tn_max, 128, min_tiles=min_n_tiles)

    # Fold the 0/1 mask once; bf16 storage halves the dominant HBM stream.
    masked_t = (filter_mat * weight).T.astype(param_dtype)    # (K, N)
    w_p = jnp.pad(masked_t, ((0, Kp - in_dim), (0, Np - out_dim)))

    b = jnp.zeros((out_dim,), jnp.float32) if bias is None else bias.astype(jnp.float32)
    b_p = jnp.pad(b, (0, Np - out_dim)).reshape(1, Np)

    return {"w": w_p, "b": b_p, "tn": tn, "tk": tk,
            "out_dim": out_dim, "in_dim": in_dim}


def filter_linear(x, params, *, tm_max=256):
    """out = x @ (filter * weight).T + bias, using pre-folded params."""
    B, in_dim = x.shape
    assert in_dim == params["in_dim"], "input feature dim mismatch"
    w_p, b_p = params["w"], params["b"]
    Kp, Np = w_p.shape
    tn, tk, out_dim = params["tn"], params["tk"], params["out_dim"]

    Mp = _round_up(B, 8)
    tm = _pick_tile(Mp, tm_max, 8)

    x_p = x.astype(jnp.float32)
    if (Mp, Kp) != (B, in_dim):
        # Zero-padded K columns hit zero-padded weight rows -> contribute 0.
        x_p = jnp.pad(x_p, ((0, Mp - B), (0, Kp - in_dim)))

    grid = (Mp // tm, Np // tn, Kp // tk)

    cost = pl.CostEstimate(
        flops=2 * Mp * Np * Kp,
        transcendentals=0,
        bytes_accessed=(x_p.size * x_p.dtype.itemsize
                        + w_p.size * w_p.dtype.itemsize
                        + b_p.size * b_p.dtype.itemsize
                        + Mp * Np * 4),
    )

    out = pl.pallas_call(
        _filter_linear_kernel,
        out_shape=jax.ShapeDtypeStruct((Mp, Np), jnp.float32),
        grid_spec=pltpu.PrefetchScalarGridSpec(
            num_scalar_prefetch=0,
            grid=grid,
            in_specs=[
                pl.BlockSpec((tm, tk), lambda i, j, k: (i, k)),   # x
                pl.BlockSpec((tk, tn), lambda i, j, k: (k, j)),   # (filter*W)^T, bf16
                pl.BlockSpec((1, tn), lambda i, j, k: (0, j)),    # bias (k-invariant)
            ],
            out_specs=pl.BlockSpec((tm, tn), lambda i, j, k: (i, j)),
        ),
        compiler_params=pltpu.CompilerParams(
            dimension_semantics=("parallel", "parallel", "arbitrary"),
            vmem_limit_bytes=32 * 1024 * 1024,
        ),
        cost_estimate=cost,
    )(x_p, w_p, b_p)

    return out[:B, :out_dim]


if __name__ == "__main__":
    key = jax.random.PRNGKey(0)

    def make_case(case_key, batch, dim):
        # FilterLinear in GRU-D uses a square 0/1 filter matrix (input_dim == output_dim).
        k_x, k_w, k_b, k_f = jax.random.split(case_key, 4)
        stdv = 1.0 / math.sqrt(dim)
        weight = jax.random.uniform(k_w, (dim, dim), jnp.float32, -stdv, stdv)
        bias = jax.random.uniform(k_b, (dim,), jnp.float32, -stdv, stdv)
        filter_mat = jax.random.bernoulli(k_f, p=0.5, shape=(dim, dim)).astype(jnp.float32)
        x = jax.random.normal(k_x, (batch, dim), jnp.float32)
        return x, weight, filter_mat, bias

    k1, k2, k3 = jax.random.split(key, 3)
    # (key, batch, dim, prep-kwargs): case 2 forces K/N tiling to exercise the
    # in-place accumulator; case 3 exercises non-(8,128)-aligned padding.
    cases = (
        (k1, 8, 32, {}),
        (k2, 16, 256, {"tk_max": 128, "tn_max": 128}),
        (k3, 8, 300, {}),
    )

    for case_key, batch, dim, prep_kwargs in cases:
        x, weight, filter_mat, bias = make_case(case_key, batch, dim)

        params = prepare_filter_linear_params(weight, filter_mat, bias, **prep_kwargs)
        out = jax.block_until_ready(filter_linear(x, params))

        masked = filter_mat * weight
        # Reference with the same bf16 weight quantization (0/1 filter is exact in bf16).
        masked_q = masked.astype(jnp.bfloat16).astype(jnp.float32)
        ref_q = jnp.dot(x, masked_q.T, precision=jax.lax.Precision.HIGHEST) + bias
        # Exact f32 reference (looser tolerance covers the bf16 weight storage).
        ref = jnp.dot(x, masked.T, precision=jax.lax.Precision.HIGHEST) + bias

        assert out.shape == (batch, dim)
        assert jnp.allclose(out, ref_q, atol=2e-3, rtol=2e-3), f"kernel mismatch at dim={dim}"
        assert jnp.allclose(out, ref, atol=2e-2, rtol=2e-2), f"quantization drift at dim={dim}"

    print("KERNEL_OK")
</pallas_src>

<mosaic_0001>
module attributes {stable_mosaic.version = 11 : i64} {
  func.func @_filter_linear_kernel(%arg0: i32, %arg1: i32, %arg2: i32, %arg3: memref<8x128xf32, #tpu.memory_space<vmem>>, %arg4: memref<128x128xbf16, #tpu.memory_space<vmem>>, %arg5: memref<1x128xf32, #tpu.memory_space<vmem>>, %arg6: memref<8x128xf32, #tpu.memory_space<vmem>>) attributes {dimension_semantics = [#tpu.dimension_semantics<parallel>, #tpu.dimension_semantics<parallel>, #tpu.dimension_semantics<arbitrary>], iteration_bounds = array<i64: 1, 1, 1>, scalar_prefetch = 0 : i64, scratch_operands = 0 : i64, tpu.core_type = #tpu.core_type<tc>, window_params = [{transform_indices = @transform_0, window_bounds = array<i64: 8, 128>}, {transform_indices = @transform_1, window_bounds = array<i64: 128, 128>}, {transform_indices = @transform_2, window_bounds = array<i64: 1, 128>}, {transform_indices = @transform_3, window_bounds = array<i64: 8, 128>}]} {
    %c0_i32 = arith.constant 0 : i32
    %0 = arith.cmpi eq, %arg2, %c0_i32 : i32
    %1 = arith.extui %0 : i1 to i32
    %c0_i32_0 = arith.constant 0 : i32
    %2 = arith.cmpi ne, %1, %c0_i32_0 : i32
    scf.if %2 {
      %cst_10 = arith.constant 0.000000e+00 : f32
      %13 = vector.broadcast %cst_10 : f32 to vector<8x128xf32>
      %c0_11 = arith.constant 0 : index
      %c0_12 = arith.constant 0 : index
      %14 = vector.load %arg6[%c0_11, %c0_12] : memref<8x128xf32, #tpu.memory_space<vmem>>, vector<8x128xf32>
      tpu.vector_store %arg6[%c0_11, %c0_12], %13 {strides = array<i32>} : memref<8x128xf32, #tpu.memory_space<vmem>>, vector<8x128xf32>,
    } else {
    }
    %c0 = arith.constant 0 : index
    %c0_1 = arith.constant 0 : index
    %3 = vector.load %arg4[%c0, %c0_1] : memref<128x128xbf16, #tpu.memory_space<vmem>>, vector<128x128xbf16>
    %4 = arith.extf %3 : vector<128x128xbf16> to vector<128x128xf32>
    %c0_2 = arith.constant 0 : index
    %c0_3 = arith.constant 0 : index
    %5 = vector.load %arg6[%c0_2, %c0_3] : memref<8x128xf32, #tpu.memory_space<vmem>>, vector<8x128xf32>
    %c0_4 = arith.constant 0 : index
    %c0_5 = arith.constant 0 : index
    %6 = vector.load %arg3[%c0_4, %c0_5] : memref<8x128xf32, #tpu.memory_space<vmem>>, vector<8x128xf32>
    %cst = arith.constant dense<0.000000e+00> : vector<8x128xf32>
    %7 = tpu.matmul %6, %4, %cst {dimension_numbers = #tpu.dot_dimension_numbers<[1], [0], [0], [1], [0, 0, 1, 1], [], []>} : vector<8x128xf32>, vector<128x128xf32>, vector<8x128xf32> -> vector<8x128xf32>
    %8 = arith.addf %5, %7 : vector<8x128xf32>
    %c0_6 = arith.constant 0 : index
    %c0_7 = arith.constant 0 : index
    %9 = vector.load %arg6[%c0_6, %c0_7] : memref<8x128xf32, #tpu.memory_space<vmem>>, vector<8x128xf32>
    tpu.vector_store %arg6[%c0_6, %c0_7], %8 {strides = array<i32>} : memref<8x128xf32, #tpu.memory_space<vmem>>, vector<8x128xf32>,
    %c0_i32_8 = arith.constant 0 : i32
    %10 = arith.cmpi eq, %arg2, %c0_i32_8 : i32
    %11 = arith.extui %10 : i1 to i32
    %c0_i32_9 = arith.constant 0 : i32
    %12 = arith.cmpi ne, %11, %c0_i32_9 : i32
    scf.if %12 {
      %c0_10 = arith.constant 0 : index
      %c0_11 = arith.constant 0 : index
      %13 = vector.load %arg6[%c0_10, %c0_11] : memref<8x128xf32, #tpu.memory_space<vmem>>, vector<8x128xf32>
      %c0_12 = arith.constant 0 : index
      %c0_13 = arith.constant 0 : index
      %14 = vector.load %arg5[%c0_12, %c0_13] : memref<1x128xf32, #tpu.memory_space<vmem>>, vector<1x128xf32>
      %15 = vector.broadcast %14 : vector<1x128xf32> to vector<8x128xf32>
      %16 = arith.addf %13, %15 : vector<8x128xf32>
      %c0_14 = arith.constant 0 : index
      %c0_15 = arith.constant 0 : index
      %17 = vector.load %arg6[%c0_14, %c0_15] : memref<8x128xf32, #tpu.memory_space<vmem>>, vector<8x128xf32>
      tpu.vector_store %arg6[%c0_14, %c0_15], %16 {strides = array<i32>} : memref<8x128xf32, #tpu.memory_space<vmem>>, vector<8x128xf32>,
    } else {
    }
    return
  }
  func.func @transform_0(%arg0: i32, %arg1: i32, %arg2: i32) -> (i32, i32) {
    %c0_i32 = arith.constant 0 : i32
    return %arg0, %arg2 : i32, i32
  }
  func.func @transform_1(%arg0: i32, %arg1: i32, %arg2: i32) -> (i32, i32) {
    %c0_i32 = arith.constant 0 : i32
    return %arg2, %arg1 : i32, i32
  }
  func.func @transform_2(%arg0: i32, %arg1: i32, %arg2: i32) -> (i32, i32) {
    %c0_i32 = arith.constant 0 : i32
    %c0_i32_0 = arith.constant 0 : i32
    return %c0_i32, %arg1 : i32, i32
  }
  func.func @transform_3(%arg0: i32, %arg1: i32, %arg2: i32) -> (i32, i32) {
    %c0_i32 = arith.constant 0 : i32
    return %arg0, %arg1 : i32, i32
  }
}

</mosaic_0001>

<llo_original>
// kernel: tpu_custom_call.1
$region0: #{tpu_custom_call.1}
  #allocation0 [shape = 'u32[]', space=smem, size = 0x4, offset = 0x4, fixed_abs, tag = 'smem constant byte address 0x4 - core index']
  #allocation1 [shape = 'u32[72,128]{1,0:T(1,128)}', space=vmem, size = 0x9000, scoped, tag = 'internal scratch']
  %s0 = inlined_call_operand.hbm [shape: f32[8,128], index: 0, kind: input, shape index: {}]
  %s1 = inlined_call_operand.hbm [shape: bf16[128,128], index: 1, kind: input, shape index: {}]
  %s2 = inlined_call_operand.vmem [shape: f32[1,128], index: 2, kind: input, shape index: {}]
  %s3 = inlined_call_operand.hbm [shape: f32[8,128], index: 3, kind: output, shape index: {}]
  %s4 = sld [smem:[#allocation0]]
  $region38: #{tpu_custom_call.1} parent=0
    _
  %s6 = ssub.s32 1, %s4
  %s7 = scalar_select 0, %s6, %s4
  $region1: #{tpu_custom_call.1} parent=0
    #allocation2 [shape = 'u8[4096]{0}', space=vmem, size = 0x1000, scoped, tag = 'input window, operand 0, single buffered']
    #allocation3 [shape = 's32[1]{0}', space=sflag, size = 0x4, scoped, tag = 'scoped memory for tpu_custom_call.1']
    #allocation4 [shape = 's32[1]{0}', space=sflag, size = 0x4, scoped, tag = 'scoped memory for tpu_custom_call.1']
    #allocation5 [shape = 'u8[32768]{0}', space=vmem, size = 0x8000, scoped, tag = 'input window, operand 1, single buffered']
    #allocation6 [shape = 's32[1]{0}', space=sflag, size = 0x4, scoped, tag = 'scoped memory for tpu_custom_call.1']
    #allocation7 [shape = 'u8[4096]{0}', space=vmem, size = 0x1000, scoped, tag = 'output window, operand 0, single buffered']
    %8 = vsyncpa [#allocation3], 0
    %9 = vsyncpa [#allocation6], 0
    %10 = vsyncpa [#allocation4], 0
    // Predicated region
    $region2: #{tpu_custom_call.1} parent=1 // pred_check
      _
    $region3: #{tpu_custom_call.1} parent=1 // pred_check_branch
      %12 = sbr.rel (0) target = $region5
    $region4: #{tpu_custom_call.1} parent=1 // pred_region
      %14 = vsyncadd [#allocation3], 0
      %s16 = sshll.u32 %s0, 4
      %s17 = int_to_ptr.hbm [resolvable:$true] %s16
      %s18 = sshll.u32 [#allocation2], 4
      %s19 = int_to_ptr.vmem [resolvable:$true] %s18
      %21 = dma.hbm_to_vmem [thread:$0]  %s17, 128, %s19, [#allocation3]
    $region5: #{tpu_custom_call.1} parent=1 // pred_fallthru
      _
    // Predicated region
    $region6: #{tpu_custom_call.1} parent=1 // pred_check
      _
    $region7: #{tpu_custom_call.1} parent=1 // pred_check_branch
      %23 = sbr.rel (0) target = $region9
    $region8: #{tpu_custom_call.1} parent=1 // pred_region
      %25 = vsyncadd [#allocation6], 0
      %s26 = sshll.u32 %s1, 4
      %s27 = int_to_ptr.hbm [resolvable:$true] %s26
      %s28 = sshll.u32 [#allocation5], 4
      %s29 = int_to_ptr.vmem [resolvable:$true] %s28
      %34 = dma.hbm_to_vmem [thread:$0]  %s27, 1024, %s29, [#allocation6], 64, 64, 4
    $region9: #{tpu_custom_call.1} parent=1 // pred_fallthru
      _
    // Predicated region
    $region10: #{tpu_custom_call.1} parent=1 // pred_check
      _
    $region11: #{tpu_custom_call.1} parent=1 // pred_check_branch
      %36 = sbr.rel (0) target = $region13
    $region12: #{tpu_custom_call.1} parent=1 // pred_region
      _
    $region13: #{tpu_custom_call.1} parent=1 // pred_fallthru
      _
    // Predicated region
    $region14: #{tpu_custom_call.1} parent=1 // pred_check
      _
    $region15: #{tpu_custom_call.1} parent=1 // pred_check_branch
      %38 = sbr.rel (0) target = $region17
    $region16: #{tpu_custom_call.1} parent=1 // pred_region
      %40 = dma.done [#allocation3], 128
    $region17: #{tpu_custom_call.1} parent=1 // pred_fallthru
      _
    // Predicated region
    $region18: #{tpu_custom_call.1} parent=1 // pred_check
      _
    $region19: #{tpu_custom_call.1} parent=1 // pred_check_branch
      %42 = sbr.rel (0) target = $region21
    $region20: #{tpu_custom_call.1} parent=1 // pred_region
      %44 = dma.done [#allocation6], 1024
    $region21: #{tpu_custom_call.1} parent=1 // pred_fallthru
      _
    %p45 = scmp.eq.s32.totalorder 0, 0
    // Predicated region
    $region22: #{tpu_custom_call.1} parent=1 // pred_check
      %p46 = pneg %p45
    $region23: #{tpu_custom_call.1} parent=1 // pred_check_branch
      %48 = sbr.rel (%p46) target = $region25
    $region24: #{tpu_custom_call.1} parent=1 // pred_region
      %49 = vst [vmem:[#allocation7] sm:$0xff] 0.0
    $region25: #{tpu_custom_call.1} parent=1 // pred_fallthru
      _
    %v50 = vld [vmem:[#allocation5] sm:$0xf]
    %v51 = vld [vmem:[#allocation5 + $0x4] sm:$0xf]
    %v52 = vld [vmem:[#allocation5 + $0x8] sm:$0xf]
    %v53 = vld [vmem:[#allocation5 + $0xc] sm:$0xf]
    %v54 = vld [vmem:[#allocation5 + $0x10] sm:$0xf]
    %v55 = vld [vmem:[#allocation5 + $0x14] sm:$0xf]
    %v56 = vld [vmem:[#allocation5 + $0x18] sm:$0xf]
    %v57 = vld [vmem:[#allocation5 + $0x1c] sm:$0xf]
    %v58 = vld [vmem:[#allocation5 + $0x20] sm:$0xf]
    %v59 = vld [vmem:[#allocation5 + $0x24] sm:$0xf]
    %v60 = vld [vmem:[#allocation5 + $0x28] sm:$0xf]
    %v61 = vld [vmem:[#allocation5 + $0x2c] sm:$0xf]
    %v62 = vld [vmem:[#allocation5 + $0x30] sm:$0xf]
    %v63 = vld [vmem:[#allocation5 + $0x34] sm:$0xf]
    %v64 = vld [vmem:[#allocation5 + $0x38] sm:$0xf]
    %v65 = vld [vmem:[#allocation5 + $0x3c] sm:$0xf]
    %v66 = vunpack.c.l.bf16 %v50
    %v67 = vunpack.c.l.bf16 %v51
    %v68 = vunpack.c.l.bf16 %v52
    %v69 = vunpack.c.l.bf16 %v53
    %v70 = vunpack.c.l.bf16 %v54
    %v71 = vunpack.c.l.bf16 %v55
    %v72 = vunpack.c.l.bf16 %v56
    %v73 = vunpack.c.l.bf16 %v57
    %v74 = vunpack.c.l.bf16 %v58
    %v75 = vunpack.c.l.bf16 %v59
    %v76 = vunpack.c.l.bf16 %v60
    %v77 = vunpack.c.l.bf16 %v61
    %v78 = vunpack.c.l.bf16 %v62
    %v79 = vunpack.c.l.bf16 %v63
    %v80 = vunpack.c.l.bf16 %v64
    %v81 = vunpack.c.l.bf16 %v65
    %v82 = vld [vmem:[#allocation7] sm:$0xff]
    %v83 = vld [vmem:[#allocation2] sm:$0xff]
    %84 = vmatpush.msra.mxu0 %v81
    %85 = vmatpush.msra.mxu0 %v80
    %86 = vmatpush.msra.mxu0 %v79
    %87 = vmatpush.msra.mxu0 %v78
    %88 = vmatpush.msra.mxu0 %v77
    %89 = vmatpush.msra.mxu0 %v76
    %90 = vmatpush.msra.mxu0 %v75
    %91 = vmatpush.msra.mxu0 %v74
    %92 = vmatpush.msra.mxu0 %v73
    %93 = vmatpush.msra.mxu0 %v72
    %94 = vmatpush.msra.mxu0 %v71
    %95 = vmatpush.msra.mxu0 %v70
    %96 = vmatpush.msra.mxu0 %v69
    %97 = vmatpush.msra.mxu0 %v68
    %98 = vmatpush.msra.mxu0 %v67
    %99 = vmatpush.msra.mxu0 %v66
    %100 = vmatmul.f32.gmra.mxu0 %v83
    %v101 = vpop.f32.mrf.mxu0
    %v102 = vadd.f32 0.0, %v101
    %103 = vdwg.mxu0
    %v104 = vadd.f32 %v82, %v102
    %105 = vst [vmem:[#allocation7] sm:$0xff] %v104
    // Predicated region
    $region26: #{tpu_custom_call.1} parent=1 // pred_check
      %p106 = pneg %p45
    $region27: #{tpu_custom_call.1} parent=1 // pred_check_branch
      %108 = sbr.rel (%p106) target = $region29
    $region28: #{tpu_custom_call.1} parent=1 // pred_region
      %v109 = vld [vmem:[#allocation7] sm:$0xff]
      %v110 = vld [vmem:[%s2] sm:$0x1]
      %v112 = vperm.slane %v110, 0
      %v114 = vadd.f32 %v109, %v112
      %115 = vst [vmem:[#allocation7] sm:$0xff] %v114
    $region29: #{tpu_custom_call.1} parent=1 // pred_fallthru
      _
    // Predicated region
    $region30: #{tpu_custom_call.1} parent=1 // pred_check
      _
    $region31: #{tpu_custom_call.1} parent=1 // pred_check_branch
      %117 = sbr.rel (0) target = $region33
    $region32: #{tpu_custom_call.1} parent=1 // pred_region
      %119 = vsyncadd [#allocation4], 0
      %s121 = sshll.u32 [#allocation7], 4
      %s122 = int_to_ptr.vmem [resolvable:$true] %s121
      %s123 = sshll.u32 %s3, 4
      %s124 = int_to_ptr.hbm [resolvable:$true] %s123
      %126 = dma.vmem_to_hbm [thread:$0]  %s122, 128, %s124, [#allocation4]
    $region33: #{tpu_custom_call.1} parent=1 // pred_fallthru
      _
    // Predicated region
    $region34: #{tpu_custom_call.1} parent=1 // pred_check
      _
    $region35: #{tpu_custom_call.1} parent=1 // pred_check_branch
      %128 = sbr.rel (0) target = $region37
    $region36: #{tpu_custom_call.1} parent=1 // pred_region
      %130 = dma.done [#allocation4], 128
    $region37: #{tpu_custom_call.1} parent=1 // pred_fallthru
      _
    %131 = vsyncpa [#allocation3], 1
    %132 = vsyncpa [#allocation6], 1
    %133 = vsyncpa [#allocation4], 1

</llo_original>
